<compile_context>
chip_gen: v7x
topology: tpu7x:2x2x1
jax: 0.10.0
libtpu: 0.0.40
codegen_flags: <defaults>
</compile_context>

<pallas_src>
import functools

import jax
import jax.numpy as jnp
from jax.experimental import pallas as pl
from jax.experimental.pallas import tpu as pltpu


def _round_up(x, m):
    return (x + m - 1) // m * m


def _cdiv(a, b):
    return (a + b - 1) // b


# ----------------------------- kernels --------------------------------------


def _scalenorm_kernel(scala_ref, x_ref, o_ref, *, eps, inv_d):
    """Direct path: one logical row per tile row, normalize over the lane axis."""
    x = x_ref[...].astype(jnp.float32)                      # (tm, D)
    ss = jnp.sum(x * x, axis=-1, keepdims=True)             # XLU reduce -> (tm, 1)
    scala = scala_ref[0].astype(jnp.float32)
    inv = jax.lax.rsqrt(ss * inv_d + eps) * scala           # scala folded into (tm, 1)
    o_ref[...] = (x * inv).astype(o_ref.dtype)


def _scalenorm_packed_kernel(scala_ref, x_ref, o_ref, *, eps, shift, inv_d):
    """Lane-packed path for D < 128 with 128 % D == 0 (D is a power of two).

    Each 128-lane row holds r = 128 // D logical rows back-to-back. The per-row
    sum of squares is a segmented lane reduction implemented as a matmul with a
    block-diagonal 0/1 matrix (exact in f32 via HIGHEST precision)."""
    x = x_ref[...].astype(jnp.float32)                      # (tm, 128)
    x2 = x * x
    li = jax.lax.broadcasted_iota(jnp.int32, (128, 128), 0)
    lj = jax.lax.broadcasted_iota(jnp.int32, (128, 128), 1)
    seg = ((li >> shift) == (lj >> shift)).astype(jnp.float32)   # block-diag segments
    ss = jnp.dot(x2, seg, preferred_element_type=jnp.float32,
                 precision=jax.lax.Precision.HIGHEST)        # (tm, 128) per-lane segment sum
    scala = scala_ref[0].astype(jnp.float32)
    inv = jax.lax.rsqrt(ss * inv_d + eps) * scala
    o_ref[...] = (x * inv).astype(o_ref.dtype)


# ----------------------------- wrapper ---------------------------------------


def scale_norm(x, scala, eps=1e-5, *, vmem_budget_bytes=24 * 1024 * 1024):
    """x: (..., D) array; scala: shape (1,) (or scalar) parameter."""
    orig_shape = x.shape
    out_dtype = x.dtype
    D = orig_shape[-1]
    x2d = x.reshape(-1, D)
    N = x2d.shape[0]

    # ---- layout selection: lane-dense packing for small hidden dims --------
    if D < 128 and 128 % D == 0:
        r = 128 // D                      # logical rows per 128-lane row
        pad_n = (-N) % r
        if pad_n:
            x2d = jnp.pad(x2d, ((0, pad_n), (0, 0)))
        rows = (N + pad_n) // r
        d_block = 128
        xk = x2d.reshape(rows, d_block)
        kernel = functools.partial(_scalenorm_packed_kernel, eps=eps,
                                   shift=D.bit_length() - 1, inv_d=1.0 / D)
        packed = True
    else:
        # TODO(synk): D not a multiple of 128 (and not a divisor of 128) falls
        # back to masked partial-lane stores; correct but not lane-dense.
        rows = N
        d_block = D
        xk = x2d
        kernel = functools.partial(_scalenorm_kernel, eps=eps, inv_d=1.0 / D)
        packed = False

    # ---- tile sizing against a conservative VMEM budget ---------------------
    # 2x double-buffered input + output tiles (native dtype) plus ~2 f32
    # temporaries (x_f32 and x*x) per row of the tile.
    dtype_bytes = jnp.dtype(out_dtype).itemsize
    align = 16 if dtype_bytes < 4 else 8            # bf16 sublane packing
    bytes_per_row = d_block * (4 * dtype_bytes + 2 * 4)
    tm = max(align, (vmem_budget_bytes // bytes_per_row) // align * align)

    rows_a = _round_up(rows, align)
    tm = min(tm, rows_a)
    # Prefer >=2 grid iterations (v7x megacore sharding + DMA overlap) when
    # there is more than one aligned row-group of work.
    if rows_a > align and tm >= rows_a:
        tm = max(align, _round_up(_cdiv(rows_a, 2), align))
    tm = max(align, (tm // align) * align)

    rows_padded = _round_up(rows, tm)
    if rows_padded != rows:
        xk = jnp.pad(xk, ((0, rows_padded - rows), (0, 0)))
    grid = rows_padded // tm

    # SMEM scalars are 32-bit: always hand scalar-prefetch an f32 (1,) array.
    scala32 = jnp.asarray(scala, dtype=jnp.float32).reshape(-1)[:1]

    out = pl.pallas_call(
        kernel,
        out_shape=jax.ShapeDtypeStruct((rows_padded, d_block), out_dtype),
        grid_spec=pltpu.PrefetchScalarGridSpec(
            num_scalar_prefetch=1,
            grid=(grid,),
            in_specs=[pl.BlockSpec((tm, d_block), lambda i, s: (i, 0))],
            out_specs=pl.BlockSpec((tm, d_block), lambda i, s: (i, 0)),
        ),
        compiler_params=pltpu.CompilerParams(
            dimension_semantics=("parallel",),
            vmem_limit_bytes=48 * 1024 * 1024,
        ),
    )(scala32, xk)

    out = out[:rows]
    if packed:
        out = out.reshape(-1, D)[:N]
    return out.reshape(orig_shape)


# ----------------------------- self-test --------------------------------------


def _ref(x, scala, eps):
    ms = jnp.mean(x * x, axis=-1, keepdims=True)
    return x * jax.lax.rsqrt(ms + eps) * jnp.asarray(scala, jnp.float32).reshape(-1)[0]


if __name__ == "__main__":
    key = jax.random.PRNGKey(0)
    eps = 1e-5
    # Deterministic parameter init matching nn.Parameter(torch.ones(1)).
    scala = jnp.ones((1,), dtype=jnp.float32)

    # 1) Module-consistent small shape (exercises the lane-packed D<128 path).
    B, S, D = 2, 8, 32
    x = jax.random.normal(key, (B, S, D), dtype=jnp.float32)
    out = scale_norm(x, scala, eps)
    jax.block_until_ready(out)
    ref = _ref(x, scala, eps)
    assert out.shape == x.shape and out.dtype == x.dtype
    assert jnp.allclose(out, ref, atol=1e-5, rtol=1e-4), float(
        jnp.max(jnp.abs(out - ref)))

    # 2) Lane-aligned hidden dim (exercises the direct D % 128 == 0 path,
    #    multi-step grid).
    x2 = jax.random.normal(jax.random.PRNGKey(1), (2, 16, 256), dtype=jnp.float32)
    out2 = scale_norm(x2, scala, eps)
    jax.block_until_ready(out2)
    ref2 = _ref(x2, scala, eps)
    assert out2.shape == x2.shape and out2.dtype == x2.dtype
    assert jnp.allclose(out2, ref2, atol=1e-5, rtol=1e-4), float(
        jnp.max(jnp.abs(out2 - ref2)))

    print("KERNEL_OK")
</pallas_src>

<mosaic_0001>
module attributes {stable_mosaic.version = 11 : i64} {
  func.func @_scalenorm_packed_kernel(%arg0: i32, %arg1: memref<1xf32, #tpu.memory_space<smem>>, %arg2: memref<8x128xf32, #tpu.memory_space<vmem>>, %arg3: memref<8x128xf32, #tpu.memory_space<vmem>>) attributes {dimension_semantics = [#tpu.dimension_semantics<parallel>], iteration_bounds = array<i64: 1>, scalar_prefetch = 1 : i64, scratch_operands = 0 : i64, tpu.core_type = #tpu.core_type<tc>, window_params = [{transform_indices = @transform_0, window_bounds = array<i64: 8, 128>}, {transform_indices = @transform_1, window_bounds = array<i64: 8, 128>}]} {
    %c0 = arith.constant 0 : index
    %c0_0 = arith.constant 0 : index
    %0 = vector.load %arg2[%c0, %c0_0] : memref<8x128xf32, #tpu.memory_space<vmem>>, vector<8x128xf32>
    %1 = arith.mulf %0, %0 : vector<8x128xf32>
    %2 = tpu.iota {dimensions = array<i32: 0>} : vector<128x128xi32>
    %3 = tpu.iota {dimensions = array<i32: 1>} : vector<128x128xi32>
    %c5_i32 = arith.constant 5 : i32
    %4 = vector.broadcast %c5_i32 : i32 to vector<128x128xi32>
    %5 = arith.shrsi %2, %4 : vector<128x128xi32>
    %c5_i32_1 = arith.constant 5 : i32
    %6 = vector.broadcast %c5_i32_1 : i32 to vector<128x128xi32>
    %7 = arith.shrsi %3, %6 : vector<128x128xi32>
    %8 = arith.cmpi eq, %5, %7 : vector<128x128xi32>
    %9 = arith.extui %8 : vector<128x128xi1> to vector<128x128xi32>
    %10 = arith.sitofp %9 : vector<128x128xi32> to vector<128x128xf32>
    %cst = arith.constant dense<0.000000e+00> : vector<8x128xf32>
    %11 = tpu.matmul %1, %10, %cst {dimension_numbers = #tpu.dot_dimension_numbers<[1], [0], [0], [1], [0, 0, 1, 1], [], []>, precision = #tpu.contract_precision<fp32>} : vector<8x128xf32>, vector<128x128xf32>, vector<8x128xf32> -> vector<8x128xf32>
    %c0_2 = arith.constant 0 : index
    %12 = memref.load %arg1[%c0_2] : memref<1xf32, #tpu.memory_space<smem>>
    %cst_3 = arith.constant 3.125000e-02 : f32
    %13 = vector.broadcast %cst_3 : f32 to vector<8x128xf32>
    %14 = arith.mulf %11, %13 : vector<8x128xf32>
    %cst_4 = arith.constant 9.99999974E-6 : f32
    %15 = vector.broadcast %cst_4 : f32 to vector<8x128xf32>
    %16 = arith.addf %14, %15 : vector<8x128xf32>
    %17 = math.rsqrt %16 : vector<8x128xf32>
    %18 = vector.broadcast %12 : f32 to vector<8x128xf32>
    %19 = arith.mulf %17, %18 : vector<8x128xf32>
    %20 = arith.mulf %0, %19 : vector<8x128xf32>
    %c0_5 = arith.constant 0 : index
    %c0_6 = arith.constant 0 : index
    %21 = vector.load %arg3[%c0_5, %c0_6] : memref<8x128xf32, #tpu.memory_space<vmem>>, vector<8x128xf32>
    tpu.vector_store %arg3[%c0_5, %c0_6], %20 {strides = array<i32>} : memref<8x128xf32, #tpu.memory_space<vmem>>, vector<8x128xf32>,
    return
  }
  func.func @transform_0(%arg0: i32, %arg1: memref<1xf32, #tpu.memory_space<smem>>) -> (i32, i32) {
    %c0_i32 = arith.constant 0 : i32
    %c0_i32_0 = arith.constant 0 : i32
    return %arg0, %c0_i32 : i32, i32
  }
  func.func @transform_1(%arg0: i32, %arg1: memref<1xf32, #tpu.memory_space<smem>>) -> (i32, i32) {
    %c0_i32 = arith.constant 0 : i32
    %c0_i32_0 = arith.constant 0 : i32
    return %arg0, %c0_i32 : i32, i32
  }
}

</mosaic_0001>

<llo_original>
// kernel: tpu_custom_call.1
$region0: #{tpu_custom_call.1}
  #allocation0 [shape = 'u32[]', space=smem, size = 0x4, offset = 0x4, fixed_abs, tag = 'smem constant byte address 0x4 - core index']
  #allocation1 [shape = 'u32[144,128]{1,0:T(1,128)}', space=vmem, size = 0x12000, scoped, tag = 'internal scratch']
  #allocation2 [shape = 's32[1]{0}', space=sflag, size = 0x4, scoped, tag = 'scoped memory for tpu_custom_call.1']
  #allocation3 [shape = 'f32[1]{0:T(128)S(6)}', space=smem, size = 0x200, scoped, tag = 'prefetched SMEM operand 0']
  %s0 = inlined_call_operand.<no memory space> [shape: f32[1], index: 0, kind: input, shape index: {}]
  %s1 = inlined_call_operand.hbm [shape: f32[8,128], index: 1, kind: input, shape index: {}]
  %s2 = inlined_call_operand.hbm [shape: f32[8,128], index: 2, kind: output, shape index: {}]
  %s3 = sld [smem:[#allocation0]]
  $region18: #{tpu_custom_call.1} parent=0
    _
  %s5 = ssub.s32 1, %s3
  %s6 = scalar_select 0, %s5, %s3
  %7 = sst [smem:[#allocation3]] %s0
  $region1: #{tpu_custom_call.1} parent=0
    #allocation4 [shape = 'u8[4096]{0}', space=vmem, size = 0x1000, scoped, tag = 'input window, operand 1, single buffered']
    #allocation5 [shape = 's32[1]{0}', space=sflag, size = 0x4, scoped, tag = 'scoped memory for tpu_custom_call.1']
    #allocation6 [shape = 's32[1]{0}', space=sflag, size = 0x4, scoped, tag = 'scoped memory for tpu_custom_call.1']
    #allocation7 [shape = 'u8[4096]{0}', space=vmem, size = 0x1000, scoped, tag = 'output window, operand 0, single buffered']
    %8 = vsyncpa [#allocation5], 0
    %9 = vsyncpa [#allocation6], 0
    // Predicated region
    $region2: #{tpu_custom_call.1} parent=1 // pred_check
      _
    $region3: #{tpu_custom_call.1} parent=1 // pred_check_branch
      %11 = sbr.rel (0) target = $region5
    $region4: #{tpu_custom_call.1} parent=1 // pred_region
      %s13 = ssub.s32 128, 128
      %14 = vsyncadd [#allocation5], %s13
      %s16 = sshll.u32 [#allocation4], 4
      %s17 = int_to_ptr.vmem [resolvable:$true] %s16
      %19 = dma.hbm_to_vmem [thread:$0]  %s1, 128, %s17, [#allocation5]
    $region5: #{tpu_custom_call.1} parent=1 // pred_fallthru
      _
    // Predicated region
    $region6: #{tpu_custom_call.1} parent=1 // pred_check
      _
    $region7: #{tpu_custom_call.1} parent=1 // pred_check_branch
      %21 = sbr.rel (0) target = $region9
    $region8: #{tpu_custom_call.1} parent=1 // pred_region
      %22 = dma.done [#allocation5], 128
    $region9: #{tpu_custom_call.1} parent=1 // pred_fallthru
      _
    %v23 = vld [vmem:[#allocation4] sm:$0xff]
    %v24 = vmul.f32 %v23, %v23
    %v25 = vlaneseq
    %v26 = vshrl.u32 %v25, 7
    %v27 = vadd.s32 %v26, 8
    %v28 = vadd.s32 %v26, 16
    %v29 = vadd.s32 %v26, 24
    %v30 = vadd.s32 %v26, 32
    %v31 = vadd.s32 %v26, 40
    %v32 = vadd.s32 %v26, 48
    %v33 = vadd.s32 %v26, 56
    %v34 = vadd.s32 %v26, 64
    %v35 = vadd.s32 %v26, 72
    %v36 = vadd.s32 %v26, 80
    %v37 = vadd.s32 %v26, 88
    %v38 = vadd.s32 %v26, 96
    %v39 = vadd.s32 %v26, 104
    %v40 = vadd.s32 %v26, 112
    %v41 = vadd.s32 %v26, 120
    %v42 = vlaneseq
    %v43 = vand.u32 %v42, 127
    %v44 = vshra.s32 %v26, 5
    %v45 = vshra.s32 %v27, 5
    %v46 = vshra.s32 %v28, 5
    %v47 = vshra.s32 %v29, 5
    %v48 = vshra.s32 %v30, 5
    %v49 = vshra.s32 %v31, 5
    %v50 = vshra.s32 %v32, 5
    %v51 = vshra.s32 %v33, 5
    %v52 = vshra.s32 %v34, 5
    %v53 = vshra.s32 %v35, 5
    %v54 = vshra.s32 %v36, 5
    %v55 = vshra.s32 %v37, 5
    %v56 = vshra.s32 %v38, 5
    %v57 = vshra.s32 %v39, 5
    %v58 = vshra.s32 %v40, 5
    %v59 = vshra.s32 %v41, 5
    %v60 = vshra.s32 %v43, 5
    %vm61 = vcmp.eq.s32.totalorder %v44, %v60
    %vm62 = vcmp.eq.s32.totalorder %v45, %v60
    %vm63 = vcmp.eq.s32.totalorder %v46, %v60
    %vm64 = vcmp.eq.s32.totalorder %v47, %v60
    %vm65 = vcmp.eq.s32.totalorder %v48, %v60
    %vm66 = vcmp.eq.s32.totalorder %v49, %v60
    %vm67 = vcmp.eq.s32.totalorder %v50, %v60
    %vm68 = vcmp.eq.s32.totalorder %v51, %v60
    %vm69 = vcmp.eq.s32.totalorder %v52, %v60
    %vm70 = vcmp.eq.s32.totalorder %v53, %v60
    %vm71 = vcmp.eq.s32.totalorder %v54, %v60
    %vm72 = vcmp.eq.s32.totalorder %v55, %v60
    %vm73 = vcmp.eq.s32.totalorder %v56, %v60
    %vm74 = vcmp.eq.s32.totalorder %v57, %v60
    %vm75 = vcmp.eq.s32.totalorder %v58, %v60
    %vm76 = vcmp.eq.s32.totalorder %v59, %v60
    %v77 = vsel %vm61, 1, 0
    %v78 = vsel %vm62, 1, 0
    %v79 = vsel %vm63, 1, 0
    %v80 = vsel %vm64, 1, 0
    %v81 = vsel %vm65, 1, 0
    %v82 = vsel %vm66, 1, 0
    %v83 = vsel %vm67, 1, 0
    %v84 = vsel %vm68, 1, 0
    %v85 = vsel %vm69, 1, 0
    %v86 = vsel %vm70, 1, 0
    %v87 = vsel %vm71, 1, 0
    %v88 = vsel %vm72, 1, 0
    %v89 = vsel %vm73, 1, 0
    %v90 = vsel %vm74, 1, 0
    %v91 = vsel %vm75, 1, 0
    %v92 = vsel %vm76, 1, 0
    %v93 = vcvt.s32.f32 %v77
    %v94 = vcvt.s32.f32 %v78
    %v95 = vcvt.s32.f32 %v79
    %v96 = vcvt.s32.f32 %v80
    %v97 = vcvt.s32.f32 %v81
    %v98 = vcvt.s32.f32 %v82
    %v99 = vcvt.s32.f32 %v83
    %v100 = vcvt.s32.f32 %v84
    %v101 = vcvt.s32.f32 %v85
    %v102 = vcvt.s32.f32 %v86
    %v103 = vcvt.s32.f32 %v87
    %v104 = vcvt.s32.f32 %v88
    %v105 = vcvt.s32.f32 %v89
    %v106 = vcvt.s32.f32 %v90
    %v107 = vcvt.s32.f32 %v91
    %v108 = vcvt.s32.f32 %v92
    %109 = vmatprep.subr.mxu0 0.0
    %v110 = vand.u32 %v93, 4294901760
    %111 = vmatpush1.msra.mxu0 %v110
    %112 = vmatprep.subr.mxu0 0.0
    %v113 = vand.u32 %v94, 4294901760
    %114 = vmatpush1.msra.mxu0 %v113
    %115 = vmatprep.subr.mxu0 0.0
    %v116 = vand.u32 %v95, 4294901760
    %117 = vmatpush1.msra.mxu0 %v116
    %118 = vmatprep.subr.mxu0 0.0
    %v119 = vand.u32 %v96, 4294901760
    %120 = vmatpush1.msra.mxu0 %v119
    %121 = vmatprep.subr.mxu0 0.0
    %v122 = vand.u32 %v97, 4294901760
    %123 = vmatpush1.msra.mxu0 %v122
    %124 = vmatprep.subr.mxu0 0.0
    %v125 = vand.u32 %v98, 4294901760
    %126 = vmatpush1.msra.mxu0 %v125
    %127 = vmatprep.subr.mxu0 0.0
    %v128 = vand.u32 %v99, 4294901760
    %129 = vmatpush1.msra.mxu0 %v128
    %130 = vmatprep.subr.mxu0 0.0
    %v131 = vand.u32 %v100, 4294901760
    %132 = vmatpush1.msra.mxu0 %v131
    %133 = vmatprep.subr.mxu0 0.0
    %v134 = vand.u32 %v101, 4294901760
    %135 = vmatpush1.msra.mxu0 %v134
    %136 = vmatprep.subr.mxu0 0.0
    %v137 = vand.u32 %v102, 4294901760
    %138 = vmatpush1.msra.mxu0 %v137
    %139 = vmatprep.subr.mxu0 0.0
    %v140 = vand.u32 %v103, 4294901760
    %141 = vmatpush1.msra.mxu0 %v140
    %142 = vmatprep.subr.mxu0 0.0
    %v143 = vand.u32 %v104, 4294901760
    %144 = vmatpush1.msra.mxu0 %v143
    %145 = vmatprep.subr.mxu0 0.0
    %v146 = vand.u32 %v105, 4294901760
    %147 = vmatpush1.msra.mxu0 %v146
    %148 = vmatprep.subr.mxu0 0.0
    %v149 = vand.u32 %v106, 4294901760
    %150 = vmatpush1.msra.mxu0 %v149
    %151 = vmatprep.subr.mxu0 0.0
    %v152 = vand.u32 %v107, 4294901760
    %153 = vmatpush1.msra.mxu0 %v152
    %154 = vmatprep.subr.mxu0 0.0
    %v155 = vand.u32 %v108, 4294901760
    %156 = vmatpush1.msra.mxu0 %v155
    %157 = vmatprep.subr.mxu0 0.0
    %158 = vmatpush1.msra.mxu0 0.0
    %159 = vmatprep.subr.mxu0 0.0
    %160 = vmatpush1.msra.mxu0 0.0
    %161 = vmatprep.subr.mxu0 0.0
    %162 = vmatpush1.msra.mxu0 0.0
    %163 = vmatprep.subr.mxu0 0.0
    %164 = vmatpush1.msra.mxu0 0.0
    %165 = vmatprep.subr.mxu0 0.0
    %166 = vmatpush1.msra.mxu0 0.0
    %167 = vmatprep.subr.mxu0 0.0
    %168 = vmatpush1.msra.mxu0 0.0
    %169 = vmatprep.subr.mxu0 0.0
    %170 = vmatpush1.msra.mxu0 0.0
    %171 = vmatprep.subr.mxu0 0.0
    %172 = vmatpush1.msra.mxu0 0.0
    %173 = vmatprep.subr.mxu0 0.0
    %174 = vmatpush1.msra.mxu0 0.0
    %175 = vmatprep.subr.mxu0 0.0
    %176 = vmatpush1.msra.mxu0 0.0
    %177 = vmatprep.subr.mxu0 0.0
    %178 = vmatpush1.msra.mxu0 0.0
    %179 = vmatprep.subr.mxu0 0.0
    %180 = vmatpush1.msra.mxu0 0.0
    %181 = vmatprep.subr.mxu0 0.0
    %182 = vmatpush1.msra.mxu0 0.0
    %183 = vmatprep.subr.mxu0 0.0
    %184 = vmatpush1.msra.mxu0 0.0
    %185 = vmatprep.subr.mxu0 0.0
    %186 = vmatpush1.msra.mxu0 0.0
    %187 = vmatprep.subr.mxu0 0.0
    %188 = vmatpush1.msra.mxu0 0.0
    %189 = vmatprep.mubr.f32.mxu0 0.0
    %v190 = vand.u32 %v24, 4294901760
    %v191 = vsub.f32 %v24, %v190
    %v192 = vand.u32 %v191, 4294901760
    %v193 = vsub.f32 %v191, %v192
    %v194 = vand.u32 %v193, 4294901760
    %195 = vmatmul.mubr.f32.gmra.mrb[0].mxu0 %v194
    %v196 = vpop.f32.mrb[0].mxu0
    %v197 = vadd.f32 0.0, %v196
    %v198 = vpop.f32.mrb[0].mxu0
    %199 = vdwg.mxu0
    %200 = vmatprep.subr.mxu0 0.0
    %v201 = vand.u32 %v93, 4294901760
    %v202 = vsub.f32 %v93, %v201
    %v203 = vand.u32 %v202, 4294901760
    %v204 = vsub.f32 %v202, %v203
    %v205 = vand.u32 %v204, 4294901760
    %206 = vmatpush1.msra.mxu0 %v205
    %207 = vmatprep.subr.mxu0 0.0
    %v208 = vand.u32 %v94, 4294901760
    %v209 = vsub.f32 %v94, %v208
    %v210 = vand.u32 %v209, 4294901760
    %v211 = vsub.f32 %v209, %v210
    %v212 = vand.u32 %v211, 4294901760
    %213 = vmatpush1.msra.mxu0 %v212
    %214 = vmatprep.subr.mxu0 0.0
    %v215 = vand.u32 %v95, 4294901760
    %v216 = vsub.f32 %v95, %v215
    %v217 = vand.u32 %v216, 4294901760
    %v218 = vsub.f32 %v216, %v217
    %v219 = vand.u32 %v218, 4294901760
    %220 = vmatpush1.msra.mxu0 %v219
    %221 = vmatprep.subr.mxu0 0.0
    %v222 = vand.u32 %v96, 4294901760
    %v223 = vsub.f32 %v96, %v222
    %v224 = vand.u32 %v223, 4294901760
    %v225 = vsub.f32 %v223, %v224
    %v226 = vand.u32 %v225, 4294901760
    %227 = vmatpush1.msra.mxu0 %v226
    %228 = vmatprep.subr.mxu0 0.0
    %v229 = vand.u32 %v97, 4294901760
    %v230 = vsub.f32 %v97, %v229
    %v231 = vand.u32 %v230, 4294901760
    %v232 = vsub.f32 %v230, %v231
    %v233 = vand.u32 %v232, 4294901760
    %234 = vmatpush1.msra.mxu0 %v233
    %235 = vmatprep.subr.mxu0 0.0
    %v236 = vand.u32 %v98, 4294901760
    %v237 = vsub.f32 %v98, %v236
    %v238 = vand.u32 %v237, 4294901760
    %v239 = vsub.f32 %v237, %v238
    %v240 = vand.u32 %v239, 4294901760
    %241 = vmatpush1.msra.mxu0 %v240
    %242 = vmatprep.subr.mxu0 0.0
    %v243 = vand.u32 %v99, 4294901760
    %v244 = vsub.f32 %v99, %v243
    %v245 = vand.u32 %v244, 4294901760
    %v246 = vsub.f32 %v244, %v245
    %v247 = vand.u32 %v246, 4294901760
    %248 = vmatpush1.msra.mxu0 %v247
    %249 = vmatprep.subr.mxu0 0.0
    %v250 = vand.u32 %v100, 4294901760
    %v251 = vsub.f32 %v100, %v250
    %v252 = vand.u32 %v251, 4294901760
    %v253 = vsub.f32 %v251, %v252
    %v254 = vand.u32 %v253, 4294901760
    %255 = vmatpush1.msra.mxu0 %v254
    %256 = vmatprep.subr.mxu0 0.0
    %v257 = vand.u32 %v101, 4294901760
    %v258 = vsub.f32 %v101, %v257
    %v259 = vand.u32 %v258, 4294901760
    %v260 = vsub.f32 %v258, %v259
    %v261 = vand.u32 %v260, 4294901760
    %262 = vmatpush1.msra.mxu0 %v261
    %263 = vmatprep.subr.mxu0 0.0
    %v264 = vand.u32 %v102, 4294901760
    %v265 = vsub.f32 %v102, %v264
    %v266 = vand.u32 %v265, 4294901760
    %v267 = vsub.f32 %v265, %v266
    %v268 = vand.u32 %v267, 4294901760
    %269 = vmatpush1.msra.mxu0 %v268
    %270 = vmatprep.subr.mxu0 0.0
    %v271 = vand.u32 %v103, 4294901760
    %v272 = vsub.f32 %v103, %v271
    %v273 = vand.u32 %v272, 4294901760
    %v274 = vsub.f32 %v272, %v273
    %v275 = vand.u32 %v274, 4294901760
    %276 = vmatpush1.msra.mxu0 %v275
    %277 = vmatprep.subr.mxu0 0.0
    %v278 = vand.u32 %v104, 4294901760
    %v279 = vsub.f32 %v104, %v278
    %v280 = vand.u32 %v279, 4294901760
    %v281 = vsub.f32 %v279, %v280
    %v282 = vand.u32 %v281, 4294901760
    %283 = vmatpush1.msra.mxu0 %v282
    %284 = vmatprep.subr.mxu0 0.0
    %v285 = vand.u32 %v105, 4294901760
    %v286 = vsub.f32 %v105, %v285
    %v287 = vand.u32 %v286, 4294901760
    %v288 = vsub.f32 %v286, %v287
    %v289 = vand.u32 %v288, 4294901760
    %290 = vmatpush1.msra.mxu0 %v289
    %291 = vmatprep.subr.mxu0 0.0
    %v292 = vand.u32 %v106, 4294901760
    %v293 = vsub.f32 %v106, %v292
    %v294 = vand.u32 %v293, 4294901760
    %v295 = vsub.f32 %v293, %v294
    %v296 = vand.u32 %v295, 4294901760
    %297 = vmatpush1.msra.mxu0 %v296
    %298 = vmatprep.subr.mxu0 0.0
    %v299 = vand.u32 %v107, 4294901760
    %v300 = vsub.f32 %v107, %v299
    %v301 = vand.u32 %v300, 4294901760
    %v302 = vsub.f32 %v300, %v301
    %v303 = vand.u32 %v302, 4294901760
    %304 = vmatpush1.msra.mxu0 %v303
    %305 = vmatprep.subr.mxu0 0.0
    %v306 = vand.u32 %v108, 4294901760
    %v307 = vsub.f32 %v108, %v306
    %v308 = vand.u32 %v307, 4294901760
    %v309 = vsub.f32 %v307, %v308
    %v310 = vand.u32 %v309, 4294901760
    %311 = vmatpush1.msra.mxu0 %v310
    %312 = vmatprep.subr.mxu0 0.0
    %313 = vmatpush1.msra.mxu0 0.0
    %314 = vmatprep.subr.mxu0 0.0
    %315 = vmatpush1.msra.mxu0 0.0
    %316 = vmatprep.subr.mxu0 0.0
    %317 = vmatpush1.msra.mxu0 0.0
    %318 = vmatprep.subr.mxu0 0.0
    %319 = vmatpush1.msra.mxu0 0.0
    %320 = vmatprep.subr.mxu0 0.0
    %321 = vmatpush1.msra.mxu0 0.0
    %322 = vmatprep.subr.mxu0 0.0
    %323 = vmatpush1.msra.mxu0 0.0
    %324 = vmatprep.subr.mxu0 0.0
    %325 = vmatpush1.msra.mxu0 0.0
    %326 = vmatprep.subr.mxu0 0.0
    %327 = vmatpush1.msra.mxu0 0.0
    %328 = vmatprep.subr.mxu0 0.0
    %329 = vmatpush1.msra.mxu0 0.0
    %330 = vmatprep.subr.mxu0 0.0
    %331 = vmatpush1.msra.mxu0 0.0
    %332 = vmatprep.subr.mxu0 0.0
    %333 = vmatpush1.msra.mxu0 0.0
    %334 = vmatprep.subr.mxu0 0.0
    %335 = vmatpush1.msra.mxu0 0.0
    %336 = vmatprep.subr.mxu0 0.0
    %337 = vmatpush1.msra.mxu0 0.0
    %338 = vmatprep.subr.mxu0 0.0
    %339 = vmatpush1.msra.mxu0 0.0
    %340 = vmatprep.subr.mxu0 0.0
    %341 = vmatpush1.msra.mxu0 0.0
    %342 = vmatprep.subr.mxu0 0.0
    %343 = vmatpush1.msra.mxu0 0.0
    %344 = vmatprep.mubr.f32.mxu0 0.0
    %v345 = vand.u32 %v24, 4294901760
    %346 = vmatmul.mubr.f32.gmra.mrb[0].mxu0 %v345
    %v347 = vpop.f32.mrb[0].mxu0
    %v348 = vadd.f32 %v197, %v347
    %v349 = vpop.f32.mrb[0].mxu0
    %350 = vdwg.mxu0
    %351 = vmatprep.subr.mxu0 0.0
    %v352 = vand.u32 %v93, 4294901760
    %v353 = vsub.f32 %v93, %v352
    %354 = vmatpush1.msra.mxu0 %v353
    %355 = vmatprep.subr.mxu0 0.0
    %v356 = vand.u32 %v94, 4294901760
    %v357 = vsub.f32 %v94, %v356
    %358 = vmatpush1.msra.mxu0 %v357
    %359 = vmatprep.subr.mxu0 0.0
    %v360 = vand.u32 %v95, 4294901760
    %v361 = vsub.f32 %v95, %v360
    %362 = vmatpush1.msra.mxu0 %v361
    %363 = vmatprep.subr.mxu0 0.0
    %v364 = vand.u32 %v96, 4294901760
    %v365 = vsub.f32 %v96, %v364
    %366 = vmatpush1.msra.mxu0 %v365
    %367 = vmatprep.subr.mxu0 0.0
    %v368 = vand.u32 %v97, 4294901760
    %v369 = vsub.f32 %v97, %v368
    %370 = vmatpush1.msra.mxu0 %v369
    %371 = vmatprep.subr.mxu0 0.0
    %v372 = vand.u32 %v98, 4294901760
    %v373 = vsub.f32 %v98, %v372
    %374 = vmatpush1.msra.mxu0 %v373
    %375 = vmatprep.subr.mxu0 0.0
    %v376 = vand.u32 %v99, 4294901760
    %v377 = vsub.f32 %v99, %v376
    %378 = vmatpush1.msra.mxu0 %v377
    %379 = vmatprep.subr.mxu0 0.0
    %v380 = vand.u32 %v100, 4294901760
    %v381 = vsub.f32 %v100, %v380
    %382 = vmatpush1.msra.mxu0 %v381
    %383 = vmatprep.subr.mxu0 0.0
    %v384 = vand.u32 %v101, 4294901760
    %v385 = vsub.f32 %v101, %v384
    %386 = vmatpush1.msra.mxu0 %v385
    %387 = vmatprep.subr.mxu0 0.0
    %v388 = vand.u32 %v102, 4294901760
    %v389 = vsub.f32 %v102, %v388
    %390 = vmatpush1.msra.mxu0 %v389
    %391 = vmatprep.subr.mxu0 0.0
    %v392 = vand.u32 %v103, 4294901760
    %v393 = vsub.f32 %v103, %v392
    %394 = vmatpush1.msra.mxu0 %v393
    %395 = vmatprep.subr.mxu0 0.0
    %v396 = vand.u32 %v104, 4294901760
    %v397 = vsub.f32 %v104, %v396
    %398 = vmatpush1.msra.mxu0 %v397
    %399 = vmatprep.subr.mxu0 0.0
    %v400 = vand.u32 %v105, 4294901760
    %v401 = vsub.f32 %v105, %v400
    %402 = vmatpush1.msra.mxu0 %v401
    %403 = vmatprep.subr.mxu0 0.0
    %v404 = vand.u32 %v106, 4294901760
    %v405 = vsub.f32 %v106, %v404
    %406 = vmatpush1.msra.mxu0 %v405
    %407 = vmatprep.subr.mxu0 0.0
    %v408 = vand.u32 %v107, 4294901760
    %v409 = vsub.f32 %v107, %v408
    %410 = vmatpush1.msra.mxu0 %v409
    %411 = vmatprep.subr.mxu0 0.0
    %v412 = vand.u32 %v108, 4294901760
    %v413 = vsub.f32 %v108, %v412
    %414 = vmatpush1.msra.mxu0 %v413
    %415 = vmatprep.subr.mxu0 0.0
    %416 = vmatpush1.msra.mxu0 0.0
    %417 = vmatprep.subr.mxu0 0.0
    %418 = vmatpush1.msra.mxu0 0.0
    %419 = vmatprep.subr.mxu0 0.0
    %420 = vmatpush1.msra.mxu0 0.0
    %421 = vmatprep.subr.mxu0 0.0
    %422 = vmatpush1.msra.mxu0 0.0
    %423 = vmatprep.subr.mxu0 0.0
    %424 = vmatpush1.msra.mxu0 0.0
    %425 = vmatprep.subr.mxu0 0.0
    %426 = vmatpush1.msra.mxu0 0.0
    %427 = vmatprep.subr.mxu0 0.0
    %428 = vmatpush1.msra.mxu0 0.0
    %429 = vmatprep.subr.mxu0 0.0
    %430 = vmatpush1.msra.mxu0 0.0
    %431 = vmatprep.subr.mxu0 0.0
    %432 = vmatpush1.msra.mxu0 0.0
    %433 = vmatprep.subr.mxu0 0.0
    %434 = vmatpush1.msra.mxu0 0.0
    %435 = vmatprep.subr.mxu0 0.0
    %436 = vmatpush1.msra.mxu0 0.0
    %437 = vmatprep.subr.mxu0 0.0
    %438 = vmatpush1.msra.mxu0 0.0
    %439 = vmatprep.subr.mxu0 0.0
    %440 = vmatpush1.msra.mxu0 0.0
    %441 = vmatprep.subr.mxu0 0.0
    %442 = vmatpush1.msra.mxu0 0.0
    %443 = vmatprep.subr.mxu0 0.0
    %444 = vmatpush1.msra.mxu0 0.0
    %445 = vmatprep.subr.mxu0 0.0
    %446 = vmatpush1.msra.mxu0 0.0
    %447 = vmatprep.mubr.f32.mxu0 0.0
    %v448 = vand.u32 %v24, 4294901760
    %v449 = vsub.f32 %v24, %v448
    %450 = vmatmul.mubr.f32.gmra.mrb[0].mxu0 %v449
    %v451 = vpop.f32.mrb[0].mxu0
    %v452 = vadd.f32 %v348, %v451
    %v453 = vpop.f32.mrb[0].mxu0
    %454 = vdwg.mxu0
    %455 = vmatprep.subr.mxu0 0.0
    %v456 = vand.u32 %v93, 4294901760
    %457 = vmatpush1.msra.mxu0 %v456
    %458 = vmatprep.subr.mxu0 0.0
    %v459 = vand.u32 %v94, 4294901760
    %460 = vmatpush1.msra.mxu0 %v459
    %461 = vmatprep.subr.mxu0 0.0
    %v462 = vand.u32 %v95, 4294901760
    %463 = vmatpush1.msra.mxu0 %v462
    %464 = vmatprep.subr.mxu0 0.0
    %v465 = vand.u32 %v96, 4294901760
    %466 = vmatpush1.msra.mxu0 %v465
    %467 = vmatprep.subr.mxu0 0.0
    %v468 = vand.u32 %v97, 4294901760
    %469 = vmatpush1.msra.mxu0 %v468
    %470 = vmatprep.subr.mxu0 0.0
    %v471 = vand.u32 %v98, 4294901760
    %472 = vmatpush1.msra.mxu0 %v471
    %473 = vmatprep.subr.mxu0 0.0
    %v474 = vand.u32 %v99, 4294901760
    %475 = vmatpush1.msra.mxu0 %v474
    %476 = vmatprep.subr.mxu0 0.0
    %v477 = vand.u32 %v100, 4294901760
    %478 = vmatpush1.msra.mxu0 %v477
    %479 = vmatprep.subr.mxu0 0.0
    %v480 = vand.u32 %v101, 4294901760
    %481 = vmatpush1.msra.mxu0 %v480
    %482 = vmatprep.subr.mxu0 0.0
    %v483 = vand.u32 %v102, 4294901760
    %484 = vmatpush1.msra.mxu0 %v483
    %485 = vmatprep.subr.mxu0 0.0
    %v486 = vand.u32 %v103, 4294901760
    %487 = vmatpush1.msra.mxu0 %v486
    %488 = vmatprep.subr.mxu0 0.0
    %v489 = vand.u32 %v104, 4294901760
    %490 = vmatpush1.msra.mxu0 %v489
    %491 = vmatprep.subr.mxu0 0.0
    %v492 = vand.u32 %v105, 4294901760
    %493 = vmatpush1.msra.mxu0 %v492
    %494 = vmatprep.subr.mxu0 0.0
    %v495 = vand.u32 %v106, 4294901760
    %496 = vmatpush1.msra.mxu0 %v495
    %497 = vmatprep.subr.mxu0 0.0
    %v498 = vand.u32 %v107, 4294901760
    %499 = vmatpush1.msra.mxu0 %v498
    %500 = vmatprep.subr.mxu0 0.0
    %v501 = vand.u32 %v108, 4294901760
    %502 = vmatpush1.msra.mxu0 %v501
    %503 = vmatprep.subr.mxu0 0.0
    %504 = vmatpush1.msra.mxu0 0.0
    %505 = vmatprep.subr.mxu0 0.0
    %506 = vmatpush1.msra.mxu0 0.0
    %507 = vmatprep.subr.mxu0 0.0
    %508 = vmatpush1.msra.mxu0 0.0
    %509 = vmatprep.subr.mxu0 0.0
    %510 = vmatpush1.msra.mxu0 0.0
    %511 = vmatprep.subr.mxu0 0.0
    %512 = vmatpush1.msra.mxu0 0.0
    %513 = vmatprep.subr.mxu0 0.0
    %514 = vmatpush1.msra.mxu0 0.0
    %515 = vmatprep.subr.mxu0 0.0
    %516 = vmatpush1.msra.mxu0 0.0
    %517 = vmatprep.subr.mxu0 0.0
    %518 = vmatpush1.msra.mxu0 0.0
    %519 = vmatprep.subr.mxu0 0.0
    %520 = vmatpush1.msra.mxu0 0.0
    %521 = vmatprep.subr.mxu0 0.0
    %522 = vmatpush1.msra.mxu0 0.0
    %523 = vmatprep.subr.mxu0 0.0
    %524 = vmatpush1.msra.mxu0 0.0
    %525 = vmatprep.subr.mxu0 0.0
    %526 = vmatpush1.msra.mxu0 0.0
    %527 = vmatprep.subr.mxu0 0.0
    %528 = vmatpush1.msra.mxu0 0.0
    %529 = vmatprep.subr.mxu0 0.0
    %530 = vmatpush1.msra.mxu0 0.0
    %531 = vmatprep.subr.mxu0 0.0
    %532 = vmatpush1.msra.mxu0 0.0
    %533 = vmatprep.subr.mxu0 0.0
    %534 = vmatpush1.msra.mxu0 0.0
    %535 = vmatprep.mubr.f32.mxu0 0.0
    %v536 = vand.u32 %v24, 4294901760
    %v537 = vsub.f32 %v24, %v536
    %v538 = vand.u32 %v537, 4294901760
    %539 = vmatmul.mubr.f32.gmra.mrb[0].mxu0 %v538
    %v540 = vpop.f32.mrb[0].mxu0
    %v541 = vadd.f32 %v452, %v540
    %v542 = vpop.f32.mrb[0].mxu0
    %543 = vdwg.mxu0
    %544 = vmatprep.subr.mxu0 0.0
    %v545 = vand.u32 %v93, 4294901760
    %v546 = vsub.f32 %v93, %v545
    %v547 = vand.u32 %v546, 4294901760
    %548 = vmatpush1.msra.mxu0 %v547
    %549 = vmatprep.subr.mxu0 0.0
    %v550 = vand.u32 %v94, 4294901760
    %v551 = vsub.f32 %v94, %v550
    %v552 = vand.u32 %v551, 4294901760
    %553 = vmatpush1.msra.mxu0 %v552
    %554 = vmatprep.subr.mxu0 0.0
    %v555 = vand.u32 %v95, 4294901760
    %v556 = vsub.f32 %v95, %v555
    %v557 = vand.u32 %v556, 4294901760
    %558 = vmatpush1.msra.mxu0 %v557
    %559 = vmatprep.subr.mxu0 0.0
    %v560 = vand.u32 %v96, 4294901760
    %v561 = vsub.f32 %v96, %v560
    %v562 = vand.u32 %v561, 4294901760
    %563 = vmatpush1.msra.mxu0 %v562
    %564 = vmatprep.subr.mxu0 0.0
    %v565 = vand.u32 %v97, 4294901760
    %v566 = vsub.f32 %v97, %v565
    %v567 = vand.u32 %v566, 4294901760
    %568 = vmatpush1.msra.mxu0 %v567
    %569 = vmatprep.subr.mxu0 0.0
    %v570 = vand.u32 %v98, 4294901760
    %v571 = vsub.f32 %v98, %v570
    %v572 = vand.u32 %v571, 4294901760
    %573 = vmatpush1.msra.mxu0 %v572
    %574 = vmatprep.subr.mxu0 0.0
    %v575 = vand.u32 %v99, 4294901760
    %v576 = vsub.f32 %v99, %v575
    %v577 = vand.u32 %v576, 4294901760
    %578 = vmatpush1.msra.mxu0 %v577
    %579 = vmatprep.subr.mxu0 0.0
    %v580 = vand.u32 %v100, 4294901760
    %v581 = vsub.f32 %v100, %v580
    %v582 = vand.u32 %v581, 4294901760
    %583 = vmatpush1.msra.mxu0 %v582
    %584 = vmatprep.subr.mxu0 0.0
    %v585 = vand.u32 %v101, 4294901760
    %v586 = vsub.f32 %v101, %v585
    %v587 = vand.u32 %v586, 4294901760
    %588 = vmatpush1.msra.mxu0 %v587
    %589 = vmatprep.subr.mxu0 0.0
    %v590 = vand.u32 %v102, 4294901760
    %v591 = vsub.f32 %v102, %v590
    %v592 = vand.u32 %v591, 4294901760
    %593 = vmatpush1.msra.mxu0 %v592
    %594 = vmatprep.subr.mxu0 0.0
    %v595 = vand.u32 %v103, 4294901760
    %v596 = vsub.f32 %v103, %v595
    %v597 = vand.u32 %v596, 4294901760
    %598 = vmatpush1.msra.mxu0 %v597
    %599 = vmatprep.subr.mxu0 0.0
    %v600 = vand.u32 %v104, 4294901760
    %v601 = vsub.f32 %v104, %v600
    %v602 = vand.u32 %v601, 4294901760
    %603 = vmatpush1.msra.mxu0 %v602
    %604 = vmatprep.subr.mxu0 0.0
    %v605 = vand.u32 %v105, 4294901760
    %v606 = vsub.f32 %v105, %v605
    %v607 = vand.u32 %v606, 4294901760
    %608 = vmatpush1.msra.mxu0 %v607
    %609 = vmatprep.subr.mxu0 0.0
    %v610 = vand.u32 %v106, 4294901760
    %v611 = vsub.f32 %v106, %v610
    %v612 = vand.u32 %v611, 4294901760
    %613 = vmatpush1.msra.mxu0 %v612
    %614 = vmatprep.subr.mxu0 0.0
    %v615 = vand.u32 %v107, 4294901760
    %v616 = vsub.f32 %v107, %v615
    %v617 = vand.u32 %v616, 4294901760
    %618 = vmatpush1.msra.mxu0 %v617
    %619 = vmatprep.subr.mxu0 0.0
    %v620 = vand.u32 %v108, 4294901760
    %v621 = vsub.f32 %v108, %v620
    %v622 = vand.u32 %v621, 4294901760
    %623 = vmatpush1.msra.mxu0 %v622
    %624 = vmatprep.subr.mxu0 0.0
    %625 = vmatpush1.msra.mxu0 0.0
    %626 = vmatprep.subr.mxu0 0.0
    %627 = vmatpush1.msra.mxu0 0.0
    %628 = vmatprep.subr.mxu0 0.0
    %629 = vmatpush1.msra.mxu0 0.0
    %630 = vmatprep.subr.mxu0 0.0
    %631 = vmatpush1.msra.mxu0 0.0
    %632 = vmatprep.subr.mxu0 0.0
    %633 = vmatpush1.msra.mxu0 0.0
    %634 = vmatprep.subr.mxu0 0.0
    %635 = vmatpush1.msra.mxu0 0.0
    %636 = vmatprep.subr.mxu0 0.0
    %637 = vmatpush1.msra.mxu0 0.0
    %638 = vmatprep.subr.mxu0 0.0
    %639 = vmatpush1.msra.mxu0 0.0
    %640 = vmatprep.subr.mxu0 0.0
    %641 = vmatpush1.msra.mxu0 0.0
    %642 = vmatprep.subr.mxu0 0.0
    %643 = vmatpush1.msra.mxu0 0.0
    %644 = vmatprep.subr.mxu0 0.0
    %645 = vmatpush1.msra.mxu0 0.0
    %646 = vmatprep.subr.mxu0 0.0
    %647 = vmatpush1.msra.mxu0 0.0
    %648 = vmatprep.subr.mxu0 0.0
    %649 = vmatpush1.msra.mxu0 0.0
    %650 = vmatprep.subr.mxu0 0.0
    %651 = vmatpush1.msra.mxu0 0.0
    %652 = vmatprep.subr.mxu0 0.0
    %653 = vmatpush1.msra.mxu0 0.0
    %654 = vmatprep.subr.mxu0 0.0
    %655 = vmatpush1.msra.mxu0 0.0
    %656 = vmatprep.mubr.f32.mxu0 0.0
    %v657 = vand.u32 %v24, 4294901760
    %658 = vmatmul.mubr.f32.gmra.mrb[0].mxu0 %v657
    %v659 = vpop.f32.mrb[0].mxu0
    %v660 = vadd.f32 %v541, %v659
    %v661 = vpop.f32.mrb[0].mxu0
    %662 = vdwg.mxu0
    %663 = vmatprep.subr.mxu0 0.0
    %v664 = vand.u32 %v93, 4294901760
    %665 = vmatpush1.msra.mxu0 %v664
    %666 = vmatprep.subr.mxu0 0.0
    %v667 = vand.u32 %v94, 4294901760
    %668 = vmatpush1.msra.mxu0 %v667
    %669 = vmatprep.subr.mxu0 0.0
    %v670 = vand.u32 %v95, 4294901760
    %671 = vmatpush1.msra.mxu0 %v670
    %672 = vmatprep.subr.mxu0 0.0
    %v673 = vand.u32 %v96, 4294901760
    %674 = vmatpush1.msra.mxu0 %v673
    %675 = vmatprep.subr.mxu0 0.0
    %v676 = vand.u32 %v97, 4294901760
    %677 = vmatpush1.msra.mxu0 %v676
    %678 = vmatprep.subr.mxu0 0.0
    %v679 = vand.u32 %v98, 4294901760
    %680 = vmatpush1.msra.mxu0 %v679
    %681 = vmatprep.subr.mxu0 0.0
    %v682 = vand.u32 %v99, 4294901760
    %683 = vmatpush1.msra.mxu0 %v682
    %684 = vmatprep.subr.mxu0 0.0
    %v685 = vand.u32 %v100, 4294901760
    %686 = vmatpush1.msra.mxu0 %v685
    %687 = vmatprep.subr.mxu0 0.0
    %v688 = vand.u32 %v101, 4294901760
    %689 = vmatpush1.msra.mxu0 %v688
    %690 = vmatprep.subr.mxu0 0.0
    %v691 = vand.u32 %v102, 4294901760
    %692 = vmatpush1.msra.mxu0 %v691
    %693 = vmatprep.subr.mxu0 0.0
    %v694 = vand.u32 %v103, 4294901760
    %695 = vmatpush1.msra.mxu0 %v694
    %696 = vmatprep.subr.mxu0 0.0
    %v697 = vand.u32 %v104, 4294901760
    %698 = vmatpush1.msra.mxu0 %v697
    %699 = vmatprep.subr.mxu0 0.0
    %v700 = vand.u32 %v105, 4294901760
    %701 = vmatpush1.msra.mxu0 %v700
    %702 = vmatprep.subr.mxu0 0.0
    %v703 = vand.u32 %v106, 4294901760
    %704 = vmatpush1.msra.mxu0 %v703
    %705 = vmatprep.subr.mxu0 0.0
    %v706 = vand.u32 %v107, 4294901760
    %707 = vmatpush1.msra.mxu0 %v706
    %708 = vmatprep.subr.mxu0 0.0
    %v709 = vand.u32 %v108, 4294901760
    %710 = vmatpush1.msra.mxu0 %v709
    %711 = vmatprep.subr.mxu0 0.0
    %712 = vmatpush1.msra.mxu0 0.0
    %713 = vmatprep.subr.mxu0 0.0
    %714 = vmatpush1.msra.mxu0 0.0
    %715 = vmatprep.subr.mxu0 0.0
    %716 = vmatpush1.msra.mxu0 0.0
    %717 = vmatprep.subr.mxu0 0.0
    %718 = vmatpush1.msra.mxu0 0.0
    %719 = vmatprep.subr.mxu0 0.0
    %720 = vmatpush1.msra.mxu0 0.0
    %721 = vmatprep.subr.mxu0 0.0
    %722 = vmatpush1.msra.mxu0 0.0
    %723 = vmatprep.subr.mxu0 0.0
    %724 = vmatpush1.msra.mxu0 0.0
    %725 = vmatprep.subr.mxu0 0.0
    %726 = vmatpush1.msra.mxu0 0.0
    %727 = vmatprep.subr.mxu0 0.0
    %728 = vmatpush1.msra.mxu0 0.0
    %729 = vmatprep.subr.mxu0 0.0
    %730 = vmatpush1.msra.mxu0 0.0
    %731 = vmatprep.subr.mxu0 0.0
    %732 = vmatpush1.msra.mxu0 0.0
    %733 = vmatprep.subr.mxu0 0.0
    %734 = vmatpush1.msra.mxu0 0.0
    %735 = vmatprep.subr.mxu0 0.0
    %736 = vmatpush1.msra.mxu0 0.0
    %737 = vmatprep.subr.mxu0 0.0
    %738 = vmatpush1.msra.mxu0 0.0
    %739 = vmatprep.subr.mxu0 0.0
    %740 = vmatpush1.msra.mxu0 0.0
    %741 = vmatprep.subr.mxu0 0.0
    %742 = vmatpush1.msra.mxu0 0.0
    %743 = vmatprep.mubr.f32.mxu0 0.0
    %v744 = vand.u32 %v24, 4294901760
    %745 = vmatmul.mubr.f32.gmra.mrb[0].mxu0 %v744
    %v746 = vpop.f32.mrb[0].mxu0
    %v747 = vadd.f32 %v660, %v746
    %v748 = vpop.f32.mrb[0].mxu0
    %749 = vdwg.mxu0
    %s750 = sld [smem:[#allocation3]]
    %v751 = vmul.f32 %v747, 0.03125
    %v752 = vadd.f32 %v751, 1e-05
    %v753 = vrsqrt.pop %v752
    %v754 = vstv %s750
    %v755 = vmul.f32 %v753, %v754
    %v756 = vmul.f32 %v23, %v755
    %757 = vst [vmem:[#allocation7] sm:$0xff] %v756
    // Predicated region
    $region10: #{tpu_custom_call.1} parent=1 // pred_check
      _
    $region11: #{tpu_custom_call.1} parent=1 // pred_check_branch
      %759 = sbr.rel (0) target = $region13
    $region12: #{tpu_custom_call.1} parent=1 // pred_region
      %s761 = ssub.s32 128, 128
      %762 = vsyncadd [#allocation6], %s761
      %s764 = sshll.u32 [#allocation7], 4
      %s765 = int_to_ptr.vmem [resolvable:$true] %s764
      %767 = dma.vmem_to_hbm [thread:$0]  %s765, 128, %s2, [#allocation6]
    $region13: #{tpu_custom_call.1} parent=1 // pred_fallthru
      _
    // Predicated region
    $region14: #{tpu_custom_call.1} parent=1 // pred_check
      _
    $region15: #{tpu_custom_call.1} parent=1 // pred_check_branch
      %769 = sbr.rel (0) target = $region17
    $region16: #{tpu_custom_call.1} parent=1 // pred_region
      %770 = dma.done [#allocation6], 128
    $region17: #{tpu_custom_call.1} parent=1 // pred_fallthru
      _
    %771 = vsyncpa [#allocation5], 1
    %772 = vsyncpa [#allocation6], 1

</llo_original>
